<compile_context>
chip_gen: v7x
topology: tpu7x:2x2x1
jax: 0.10.0
libtpu: 0.0.40
codegen_flags: <defaults>
</compile_context>

<pallas_src>
import functools

import jax
import jax.numpy as jnp
from jax import lax
from jax.experimental import pallas as pl
from jax.experimental.pallas import tpu as pltpu


# ----------------------------------------------------------------------------
# Kernel: fused linear + online log_softmax + target gather -> per-token logprob
# ----------------------------------------------------------------------------
def _fused_logprob_kernel(x_ref, w_ref, *rest, ignore_index, vocab_size, has_bias):
    if has_bias:
        b_ref, tgt_ref, out_ref, m_sc, l_sc, p_sc = rest
    else:
        b_ref = None
        tgt_ref, out_ref, m_sc, l_sc, p_sc = rest

    v = pl.program_id(1)           # vocab-tile index (inner reduction axis)
    nv = pl.num_programs(1)

    @pl.when(v == 0)
    def _():
        m_sc[...] = jnp.full_like(m_sc, -jnp.inf)
        l_sc[...] = jnp.zeros_like(l_sc)
        p_sc[...] = jnp.zeros_like(p_sc)

    x = x_ref[...]                 # (m_tile, H), native dtype
    w = w_ref[...]                 # (tv, H),    native dtype
    # logits = x @ w.T (MXU, f32 accumulation); RHS contracted on its last dim.
    # TODO(synk): if a Mosaic dump ever shows a per-step vxpose of this weight
    # tile, pre-transpose the weight once in the wrapper to (H, V) instead.
    logits = lax.dot_general(x, w, (((1,), (1,)), ((), ())),
                             preferred_element_type=jnp.float32)
    if has_bias:
        logits = logits + b_ref[...]                           # f32 bias
    mt, tv = logits.shape

    # Mask vocab-padding columns of the last tile (grid is cdiv(V, tv); the
    # out-of-bounds weight rows are undefined) before any reduction.
    col = lax.broadcasted_iota(jnp.int32, (mt, tv), 1)
    n_valid = vocab_size - v * tv                              # traced scalar
    logits = jnp.where(col < n_valid, logits, -jnp.inf)

    # Online log-sum-exp over the vocab axis.
    m_prev = m_sc[...]                                         # (m_tile, 1)
    m_new = jnp.maximum(m_prev, jnp.max(logits, axis=-1, keepdims=True))
    l_sc[...] = (l_sc[...] * jnp.exp(m_prev - m_new)
                 + jnp.sum(jnp.exp(logits - m_new), axis=-1, keepdims=True))
    m_sc[...] = m_new

    # Gather the logit at the target id.  Relative compare: one int subtract on
    # the (m_tile, 1) target column instead of offsetting the (m_tile, tv) iota.
    tgt = tgt_ref[...]                                         # (m_tile, 1) int32
    safe_tgt = jnp.where(tgt == ignore_index, 0, tgt)          # torch: label=0 where masked
    tgt_rel = safe_tgt - v * tv
    p_sc[...] += jnp.sum(jnp.where(col == tgt_rel, logits, 0.0),
                         axis=-1, keepdims=True)

    @pl.when(v == nv - 1)
    def _():
        log_z = m_sc[...] + jnp.log(l_sc[...])                 # (m_tile, 1)
        out_ref[...] = p_sc[...] - log_z                       # per-token log-prob


# ----------------------------------------------------------------------------
# VMEM-budget / tile selection
# ----------------------------------------------------------------------------
def _round_up(x, m):
    return ((x + m - 1) // m) * m


def _cdiv(a, b):
    return -(-a // b)


def _vmem_budget():
    """Generation-aware VMEM budget/limit (v5e/v6e: 128 MiB, v7x: 64 MiB)."""
    cap = 64 * 1024 * 1024                       # conservative default (v7x)
    try:
        info = pltpu.get_tpu_info()
        cap = int(getattr(info, "vmem_capacity_bytes", cap)) or cap
    except Exception:
        pass
    budget = min(int(cap * 0.75), cap - 16 * 1024 * 1024)
    limit = min(int(cap * 0.85), cap - 12 * 1024 * 1024)
    return max(budget, 16 * 1024 * 1024), max(limit, 24 * 1024 * 1024)


# Rough per-TC roofline constants; only used to *rank* tile choices.
_MXU_FLOPS = 9.0e14
_HBM_BW = 1.4e12
_STEP_OVERHEAD_S = 0.35e-6


def _select_tiles(M, H, V, x_bytes, w_bytes, budget):
    """Pick (m_tile, vocab_tile) maximizing arithmetic intensity under VMEM."""
    m8 = _round_up(max(M, 1), 8)
    v128 = _round_up(max(V, 1), 128)
    best = None
    for m_cand in (1024, 512, 256, 128, 64, 32, 16, 8):
        m = min(m_cand, m8)
        for v_cand in (4096, 2048, 1024, 512, 256, 128):
            tv = min(v_cand, v128)
            need = (2 * m * H * x_bytes           # activation double-buffer
                    + 2 * tv * H * w_bytes        # weight double-buffer
                    + 2 * 8 * tv * 4              # bias double-buffer (sublane-padded)
                    + 7 * m * 128 * 4             # tgt/out/scratch ((m,1) lane-padded)
                    + 2 * m * tv * 4)             # logits + elementwise temps
            if need > budget:
                continue
            nm, nv = _cdiv(M, m), _cdiv(V, tv)
            dma = nm * nv * tv * H * w_bytes / _HBM_BW      # weight streamed nm times
            mxu = nm * nv * 2.0 * m * tv * H / _MXU_FLOPS
            cost = max(dma, mxu) + nm * nv * _STEP_OVERHEAD_S
            if best is None or cost < best[0]:
                best = (cost, m, tv)
    if best is None:
        # Nothing fits (extreme H): minimal tiles; correct, compiler may spill.
        return min(8, m8), 128
    _, m_tile, vocab_tile = best
    # Keep >= 2 M tiles so the "parallel" axis spans both v7x TensorCores
    # (floor 128 per tile: below that the intensity loss outweighs the 2x win).
    if M > 256 and _cdiv(M, m_tile) < 2:
        m_tile = max(128, _round_up(_cdiv(M, 2), 128))
    return m_tile, vocab_tile


# ----------------------------------------------------------------------------
# Wrapper: per-sequence (masked) sum / mean of target-token log-probs
# ----------------------------------------------------------------------------
def fused_linear_logprob(x, weight, bias, target, *,
                         ignore_index=-100, average_log_prob=False,
                         m_tile=None, vocab_tile=None):
    B, T, H = x.shape
    V = weight.shape[0]
    M = B * T

    budget, vmem_limit = _vmem_budget()
    auto_m, auto_v = _select_tiles(M, H, V,
                                   jnp.dtype(x.dtype).itemsize,
                                   jnp.dtype(weight.dtype).itemsize,
                                   budget)
    m_tile = auto_m if m_tile is None else m_tile
    vocab_tile = auto_v if vocab_tile is None else vocab_tile
    assert m_tile % 8 == 0 or m_tile == M
    assert vocab_tile % 128 == 0 or vocab_tile == V

    # No jnp.pad: ragged last M / vocab tiles are read partially out-of-bounds
    # (undefined rows are masked / their output rows dropped on write).
    xf = x.reshape(M, H)
    tgt = target.astype(jnp.int32).reshape(M, 1)
    nm = _cdiv(M, m_tile)
    nv = _cdiv(V, vocab_tile)
    has_bias = bias is not None

    in_specs = [
        pl.BlockSpec((m_tile, H), lambda m, v: (m, 0)),          # activations
        pl.BlockSpec((vocab_tile, H), lambda m, v: (v, 0)),      # weight tile
        # NOTE: once the M tile hits the intensity target, pipeline_mode=
        # pl.Buffered(3) on the weight spec can hide residual DMA jitter.
    ]
    args = [xf, weight]
    if has_bias:
        in_specs.append(pl.BlockSpec((1, vocab_tile), lambda m, v: (0, v)))
        args.append(bias.reshape(1, V).astype(jnp.float32))      # f32 end-to-end
    in_specs.append(pl.BlockSpec((m_tile, 1), lambda m, v: (m, 0)))  # targets
    args.append(tgt)

    # TODO(synk): a scalar-prefetched per-M-tile valid-token count could skip
    # fully-masked tiles (and their weight DMA) via a count-aware index_map.
    kernel = functools.partial(_fused_logprob_kernel,
                               ignore_index=ignore_index,
                               vocab_size=V, has_bias=has_bias)
    per_tok = pl.pallas_call(
        kernel,
        out_shape=jax.ShapeDtypeStruct((M, 1), jnp.float32),
        grid_spec=pltpu.PrefetchScalarGridSpec(
            num_scalar_prefetch=0,
            grid=(nm, nv),                                       # M outer, vocab inner
            in_specs=in_specs,
            out_specs=pl.BlockSpec((m_tile, 1), lambda m, v: (m, 0)),
            scratch_shapes=[pltpu.VMEM((m_tile, 1), jnp.float32)] * 3,  # m, l, picked
        ),
        compiler_params=pltpu.CompilerParams(
            dimension_semantics=("parallel", "arbitrary"),
            vmem_limit_bytes=vmem_limit),
    )(*args)

    # Tiny O(B*T) epilogue: masked per-sequence sum / mean in plain jnp.
    per_tok = per_tok[:, 0].reshape(B, T)
    mask = (target != ignore_index).astype(jnp.float32)
    s = jnp.sum(per_tok * mask, axis=-1)
    if average_log_prob:
        # Deviation from torch: fully-masked sequences return 0 instead of NaN.
        s = s / jnp.maximum(jnp.sum(mask, axis=-1), 1.0)
    return s                                                     # (B,)


# ----------------------------------------------------------------------------
# Module-equivalent wrapper
# ----------------------------------------------------------------------------
class LigerFusedLinearKTOLoss:
    def __init__(self, ignore_index=-100, beta=0.1, compiled=True,
                 use_ref_model=False, average_log_prob=False, chunk_size=1,
                 m_tile=None, vocab_tile=None):
        self.ignore_index = ignore_index
        self.beta = beta
        self.compiled = compiled          # XLA always compiles; kept for parity
        self.use_ref_model = use_ref_model
        self.average_log_prob = average_log_prob
        # TODO(synk): chunk_size>1 reproduces a (chunk,chunk) broadcast quirk in
        # the torch reference (rewards * labels.unsqueeze(1)); we implement the
        # default chunk_size=1 semantics (plain per-sequence reductions).
        self.chunk_size = chunk_size
        self._m_tile = m_tile             # optional tile overrides (testing/tuning)
        self._vocab_tile = vocab_tile

    def __call__(self, _input, lin_weight, target, bias=None, preference_labels=None,
                 ref_input=None, ref_weight=None, ref_bias=None, kl=None):
        # For v5e, casting f32 inputs to bf16 before this call roughly doubles
        # MXU throughput if numerically acceptable; left to the caller.
        lp = fused_linear_logprob(_input, lin_weight, bias, target,
                                  ignore_index=self.ignore_index,
                                  average_log_prob=self.average_log_prob,
                                  m_tile=self._m_tile, vocab_tile=self._vocab_tile)
        if self.use_ref_model:
            rlp = fused_linear_logprob(ref_input, ref_weight, ref_bias, target,
                                       ignore_index=self.ignore_index,
                                       average_log_prob=self.average_log_prob,
                                       m_tile=self._m_tile,
                                       vocab_tile=self._vocab_tile)
            logratios = lp - rlp
        else:
            logratios = lp

        labels = preference_labels.astype(jnp.bool_)
        labf = labels.astype(jnp.float32)
        mult = jnp.where(labels, 1.0, -1.0)
        if kl is not None:
            z = self.beta * (logratios - jnp.asarray(kl, jnp.float32)) * mult
        else:
            z = self.beta * logratios * mult
        losses = 1.0 - jax.nn.sigmoid(z)
        rewards = self.beta * logratios
        # Literal `losses.sum() / full_target.shape[0]` with the (B, T) layout.
        loss = losses.sum() / target.shape[0]
        chosen_rewards_sum = jnp.sum(rewards * labf)
        rejected_rewards_sum = jnp.sum(rewards * (1.0 - labf))
        return loss, chosen_rewards_sum, rejected_rewards_sum


# ----------------------------------------------------------------------------
# Pure-JAX reference (for correctness check)
# ----------------------------------------------------------------------------
def _ref_logprob(x, w, b, tgt, ignore_index, average_log_prob):
    logits = jnp.einsum("bth,vh->btv", x, w,
                        preferred_element_type=jnp.float32)
    if b is not None:
        logits = logits + b.astype(jnp.float32)
    logp = jax.nn.log_softmax(logits, axis=-1)
    mask = tgt != ignore_index
    lbl = jnp.where(mask, tgt, 0).astype(jnp.int32)
    ptl = jnp.take_along_axis(logp, lbl[..., None], axis=-1)[..., 0]
    s = jnp.sum(ptl * mask, axis=-1)
    if average_log_prob:
        s = s / jnp.sum(mask, axis=-1)
    return s


def _ref_kto(x, w, tgt, labels, bias, ref_x, ref_w, ref_b, kl,
             ignore_index, beta, use_ref_model, average_log_prob):
    lp = _ref_logprob(x, w, bias, tgt, ignore_index, average_log_prob)
    if use_ref_model:
        lp = lp - _ref_logprob(ref_x, ref_w, ref_b, tgt, ignore_index, average_log_prob)
    mult = jnp.where(labels, 1.0, -1.0)
    klv = 0.0 if kl is None else kl
    losses = 1.0 - jax.nn.sigmoid(beta * (lp - klv) * mult)
    rewards = beta * lp
    return (losses.sum() / tgt.shape[0],
            jnp.sum(rewards * labels),
            jnp.sum(rewards * (~labels)))


# ----------------------------------------------------------------------------
if __name__ == "__main__":
    # V deliberately NOT a multiple of 128 to exercise the cdiv + mask path;
    # B*T deliberately NOT a multiple of the forced m_tile in config 2.
    B, T, H, V = 2, 12, 32, 500
    key = jax.random.PRNGKey(0)
    k = jax.random.split(key, 8)
    x = jax.random.normal(k[0], (B, T, H), jnp.float32)
    ref_x = jax.random.normal(k[1], (B, T, H), jnp.float32)
    w = jax.random.normal(k[2], (V, H), jnp.float32) * 0.05
    ref_w = jax.random.normal(k[3], (V, H), jnp.float32) * 0.05
    bias = jax.random.normal(k[4], (V,), jnp.float32) * 0.05
    ref_bias = jax.random.normal(k[5], (V,), jnp.float32) * 0.05
    target = jax.random.randint(k[6], (B, T), 0, V, dtype=jnp.int32)
    target = target.at[0, -3:].set(-100)           # exercise ignore_index masking
    preference_labels = jnp.array([True, False])
    kl = jnp.float32(0.3)                          # scalar KL estimate

    # Config 1: module defaults (no ref model, no bias, no kl), auto tiling
    # (single M tile, single 512-wide vocab tile with 12 masked padding cols).
    m1 = LigerFusedLinearKTOLoss()
    out1 = m1(x, w, target, bias=None, preference_labels=preference_labels)
    ref1 = _ref_kto(x, w, target, preference_labels, None,
                    ref_x, ref_w, ref_bias, None, -100, 0.1, False, False)

    # Config 2: ref model + bias + scalar kl + average_log_prob, with forced
    # small tiles (m_tile=16 -> ragged last M tile, vocab_tile=128 -> 4 vocab
    # steps, last one 116 valid cols) to exercise the multi-tile online
    # logsumexp, vocab masking and out-of-bounds row handling.
    m2 = LigerFusedLinearKTOLoss(use_ref_model=True, average_log_prob=True,
                                 beta=0.2, m_tile=16, vocab_tile=128)
    out2 = m2(x, w, target, bias=bias, preference_labels=preference_labels,
              ref_input=ref_x, ref_weight=ref_w, ref_bias=ref_bias, kl=kl)
    ref2 = _ref_kto(x, w, target, preference_labels, bias,
                    ref_x, ref_w, ref_bias, kl, -100, 0.2, True, True)

    for got, want in zip(out1 + out2, ref1 + ref2):
        got = jax.block_until_ready(got)
        assert jnp.allclose(got, want, rtol=1e-3, atol=1e-3), (got, want)

    print("KERNEL_OK")
</pallas_src>

<mosaic_0001>
module attributes {stable_mosaic.version = 11 : i64} {
  func.func @_fused_logprob_kernel(%arg0: i32, %arg1: i32, %arg2: memref<24x32xf32, #tpu.memory_space<vmem>>, %arg3: memref<512x32xf32, #tpu.memory_space<vmem>>, %arg4: memref<24x1xi32, #tpu.memory_space<vmem>>, %arg5: memref<24x1xf32, #tpu.memory_space<vmem>>, %arg6: memref<24x1xf32, #tpu.memory_space<vmem>>, %arg7: memref<24x1xf32, #tpu.memory_space<vmem>>, %arg8: memref<24x1xf32, #tpu.memory_space<vmem>>) attributes {dimension_semantics = [#tpu.dimension_semantics<parallel>, #tpu.dimension_semantics<arbitrary>], iteration_bounds = array<i64: 1, 1>, scalar_prefetch = 0 : i64, scratch_operands = 3 : i64, tpu.core_type = #tpu.core_type<tc>, window_params = [{transform_indices = @transform_0, window_bounds = array<i64: 24, 32>}, {transform_indices = @transform_1, window_bounds = array<i64: 512, 32>}, {transform_indices = @transform_2, window_bounds = array<i64: 24, 1>}, {transform_indices = @transform_3, window_bounds = array<i64: 24, 1>}]} {
    %c0_i32 = arith.constant 0 : i32
    %0 = arith.cmpi eq, %arg1, %c0_i32 : i32
    %1 = arith.extui %0 : i1 to i32
    %c0_i32_0 = arith.constant 0 : i32
    %2 = arith.cmpi ne, %1, %c0_i32_0 : i32
    scf.if %2 {
      %cst_27 = arith.constant 0xFF800000 : f32
      %49 = vector.broadcast %cst_27 : f32 to vector<24x1xf32>
      %c0_28 = arith.constant 0 : index
      %c0_29 = arith.constant 0 : index
      %50 = vector.load %arg6[%c0_28, %c0_29] : memref<24x1xf32, #tpu.memory_space<vmem>>, vector<24x1xf32>
      tpu.vector_store %arg6[%c0_28, %c0_29], %49 {strides = array<i32>} : memref<24x1xf32, #tpu.memory_space<vmem>>, vector<24x1xf32>,
      %cst_30 = arith.constant 0.000000e+00 : f32
      %51 = vector.broadcast %cst_30 : f32 to vector<24x1xf32>
      %c0_31 = arith.constant 0 : index
      %c0_32 = arith.constant 0 : index
      %52 = vector.load %arg7[%c0_31, %c0_32] : memref<24x1xf32, #tpu.memory_space<vmem>>, vector<24x1xf32>
      tpu.vector_store %arg7[%c0_31, %c0_32], %51 {strides = array<i32>} : memref<24x1xf32, #tpu.memory_space<vmem>>, vector<24x1xf32>,
      %cst_33 = arith.constant 0.000000e+00 : f32
      %53 = vector.broadcast %cst_33 : f32 to vector<24x1xf32>
      %c0_34 = arith.constant 0 : index
      %c0_35 = arith.constant 0 : index
      %54 = vector.load %arg8[%c0_34, %c0_35] : memref<24x1xf32, #tpu.memory_space<vmem>>, vector<24x1xf32>
      tpu.vector_store %arg8[%c0_34, %c0_35], %53 {strides = array<i32>} : memref<24x1xf32, #tpu.memory_space<vmem>>, vector<24x1xf32>,
    } else {
    }
    %c0 = arith.constant 0 : index
    %c0_1 = arith.constant 0 : index
    %3 = vector.load %arg2[%c0, %c0_1] : memref<24x32xf32, #tpu.memory_space<vmem>>, vector<24x32xf32>
    %c0_2 = arith.constant 0 : index
    %c0_3 = arith.constant 0 : index
    %4 = vector.load %arg3[%c0_2, %c0_3] : memref<512x32xf32, #tpu.memory_space<vmem>>, vector<512x32xf32>
    %cst = arith.constant dense<0.000000e+00> : vector<24x512xf32>
    %5 = tpu.matmul %3, %4, %cst {dimension_numbers = #tpu.dot_dimension_numbers<[1], [1], [0], [0], [0, 0, 1, 0], [], []>} : vector<24x32xf32>, vector<512x32xf32>, vector<24x512xf32> -> vector<24x512xf32>
    %6 = tpu.iota {dimensions = array<i32: 1>} : vector<24x512xi32>
    %c512_i32 = arith.constant 512 : i32
    %7 = arith.muli %arg1, %c512_i32 : i32
    %c500_i32 = arith.constant 500 : i32
    %8 = arith.subi %c500_i32, %7 : i32
    %9 = vector.broadcast %8 : i32 to vector<24x512xi32>
    %10 = arith.cmpi slt, %6, %9 : vector<24x512xi32>
    %cst_4 = arith.constant 0xFF800000 : f32
    %11 = vector.broadcast %cst_4 : f32 to vector<24x512xf32>
    %12 = arith.select %10, %5, %11 : vector<24x512xi1>, vector<24x512xf32>
    %c0_5 = arith.constant 0 : index
    %c0_6 = arith.constant 0 : index
    %13 = vector.load %arg6[%c0_5, %c0_6] : memref<24x1xf32, #tpu.memory_space<vmem>>, vector<24x1xf32>
    %cst_7 = arith.constant dense<0xFF800000> : vector<24xf32>
    %14 = vector.multi_reduction <maximumf>, %12, %cst_7 [1] : vector<24x512xf32> to vector<24xf32>
    %15 = vector.shape_cast %14 : vector<24xf32> to vector<24x1xf32>
    %16 = arith.maximumf %13, %15 : vector<24x1xf32>
    %c0_8 = arith.constant 0 : index
    %c0_9 = arith.constant 0 : index
    %17 = vector.load %arg7[%c0_8, %c0_9] : memref<24x1xf32, #tpu.memory_space<vmem>>, vector<24x1xf32>
    %18 = arith.subf %13, %16 : vector<24x1xf32>
    %19 = math.exp %18 : vector<24x1xf32>
    %20 = arith.mulf %17, %19 : vector<24x1xf32>
    %21 = vector.broadcast %16 : vector<24x1xf32> to vector<24x512xf32>
    %22 = arith.subf %12, %21 : vector<24x512xf32>
    %23 = math.exp %22 : vector<24x512xf32>
    %cst_10 = arith.constant dense<0.000000e+00> : vector<24xf32>
    %24 = vector.multi_reduction <add>, %23, %cst_10 [1] : vector<24x512xf32> to vector<24xf32>
    %25 = vector.shape_cast %24 : vector<24xf32> to vector<24x1xf32>
    %26 = arith.addf %20, %25 : vector<24x1xf32>
    %c0_11 = arith.constant 0 : index
    %c0_12 = arith.constant 0 : index
    %27 = vector.load %arg7[%c0_11, %c0_12] : memref<24x1xf32, #tpu.memory_space<vmem>>, vector<24x1xf32>
    tpu.vector_store %arg7[%c0_11, %c0_12], %26 {strides = array<i32>} : memref<24x1xf32, #tpu.memory_space<vmem>>, vector<24x1xf32>,
    %c0_13 = arith.constant 0 : index
    %c0_14 = arith.constant 0 : index
    %28 = vector.load %arg6[%c0_13, %c0_14] : memref<24x1xf32, #tpu.memory_space<vmem>>, vector<24x1xf32>
    tpu.vector_store %arg6[%c0_13, %c0_14], %16 {strides = array<i32>} : memref<24x1xf32, #tpu.memory_space<vmem>>, vector<24x1xf32>,
    %c0_15 = arith.constant 0 : index
    %c0_16 = arith.constant 0 : index
    %29 = vector.load %arg4[%c0_15, %c0_16] : memref<24x1xi32, #tpu.memory_space<vmem>>, vector<24x1xi32>
    %c-100_i32 = arith.constant -100 : i32
    %30 = vector.broadcast %c-100_i32 : i32 to vector<24x1xi32>
    %31 = arith.cmpi eq, %29, %30 : vector<24x1xi32>
    %c0_i32_17 = arith.constant 0 : i32
    %32 = vector.broadcast %c0_i32_17 : i32 to vector<24x1xi32>
    %33 = arith.select %31, %32, %29 : vector<24x1xi1>, vector<24x1xi32>
    %c512_i32_18 = arith.constant 512 : i32
    %34 = arith.muli %arg1, %c512_i32_18 : i32
    %35 = vector.broadcast %34 : i32 to vector<24x1xi32>
    %36 = arith.subi %33, %35 : vector<24x1xi32>
    %c0_19 = arith.constant 0 : index
    %c0_20 = arith.constant 0 : index
    %37 = vector.load %arg8[%c0_19, %c0_20] : memref<24x1xf32, #tpu.memory_space<vmem>>, vector<24x1xf32>
    %38 = vector.broadcast %36 : vector<24x1xi32> to vector<24x512xi32>
    %39 = arith.cmpi eq, %6, %38 : vector<24x512xi32>
    %cst_21 = arith.constant 0.000000e+00 : f32
    %40 = vector.broadcast %cst_21 : f32 to vector<24x512xf32>
    %41 = arith.select %39, %12, %40 : vector<24x512xi1>, vector<24x512xf32>
    %cst_22 = arith.constant dense<0.000000e+00> : vector<24xf32>
    %42 = vector.multi_reduction <add>, %41, %cst_22 [1] : vector<24x512xf32> to vector<24xf32>
    %43 = vector.shape_cast %42 : vector<24xf32> to vector<24x1xf32>
    %44 = arith.addf %37, %43 : vector<24x1xf32>
    %c0_23 = arith.constant 0 : index
    %c0_24 = arith.constant 0 : index
    %45 = vector.load %arg8[%c0_23, %c0_24] : memref<24x1xf32, #tpu.memory_space<vmem>>, vector<24x1xf32>
    tpu.vector_store %arg8[%c0_23, %c0_24], %44 {strides = array<i32>} : memref<24x1xf32, #tpu.memory_space<vmem>>, vector<24x1xf32>,
    %c0_i32_25 = arith.constant 0 : i32
    %46 = arith.cmpi eq, %arg1, %c0_i32_25 : i32
    %47 = arith.extui %46 : i1 to i32
    %c0_i32_26 = arith.constant 0 : i32
    %48 = arith.cmpi ne, %47, %c0_i32_26 : i32
    scf.if %48 {
      %c0_27 = arith.constant 0 : index
      %c0_28 = arith.constant 0 : index
      %49 = vector.load %arg6[%c0_27, %c0_28] : memref<24x1xf32, #tpu.memory_space<vmem>>, vector<24x1xf32>
      %c0_29 = arith.constant 0 : index
      %c0_30 = arith.constant 0 : index
      %50 = vector.load %arg7[%c0_29, %c0_30] : memref<24x1xf32, #tpu.memory_space<vmem>>, vector<24x1xf32>
      %51 = math.log %50 : vector<24x1xf32>
      %52 = arith.addf %49, %51 : vector<24x1xf32>
      %c0_31 = arith.constant 0 : index
      %c0_32 = arith.constant 0 : index
      %53 = vector.load %arg8[%c0_31, %c0_32] : memref<24x1xf32, #tpu.memory_space<vmem>>, vector<24x1xf32>
      %54 = arith.subf %53, %52 : vector<24x1xf32>
      %c0_33 = arith.constant 0 : index
      %c0_34 = arith.constant 0 : index
      %55 = vector.load %arg5[%c0_33, %c0_34] : memref<24x1xf32, #tpu.memory_space<vmem>>, vector<24x1xf32>
      tpu.vector_store %arg5[%c0_33, %c0_34], %54 {strides = array<i32>} : memref<24x1xf32, #tpu.memory_space<vmem>>, vector<24x1xf32>,
    } else {
    }
    return
  }
  func.func @transform_0(%arg0: i32, %arg1: i32) -> (i32, i32) {
    %c0_i32 = arith.constant 0 : i32
    %c0_i32_0 = arith.constant 0 : i32
    return %arg0, %c0_i32 : i32, i32
  }
  func.func @transform_1(%arg0: i32, %arg1: i32) -> (i32, i32) {
    %c0_i32 = arith.constant 0 : i32
    %c0_i32_0 = arith.constant 0 : i32
    return %arg1, %c0_i32 : i32, i32
  }
  func.func @transform_2(%arg0: i32, %arg1: i32) -> (i32, i32) {
    %c0_i32 = arith.constant 0 : i32
    %c0_i32_0 = arith.constant 0 : i32
    return %arg0, %c0_i32 : i32, i32
  }
  func.func @transform_3(%arg0: i32, %arg1: i32) -> (i32, i32) {
    %c0_i32 = arith.constant 0 : i32
    %c0_i32_0 = arith.constant 0 : i32
    return %arg0, %c0_i32 : i32, i32
  }
}

</mosaic_0001>

<llo_original>
// kernel: tpu_custom_call.1
$region0: #{tpu_custom_call.1}
  #allocation0 [shape = 'u32[]', space=smem, size = 0x4, offset = 0x4, fixed_abs, tag = 'smem constant byte address 0x4 - core index']
  #allocation1 [shape = 'u32[144,128]{1,0:T(1,128)}', space=vmem, size = 0x12000, scoped, tag = 'internal scratch']
  #allocation2 [shape = 'f32[24,1]{1,0:T(8,128)}', space=vmem, size = 0x3000, scoped, tag = 'scratch operand']
  #allocation3 [shape = 'f32[24,1]{1,0:T(8,128)}', space=vmem, size = 0x3000, scoped, tag = 'scratch operand']
  #allocation4 [shape = 'f32[24,1]{1,0:T(8,128)}', space=vmem, size = 0x3000, scoped, tag = 'scratch operand']
  %s0 = inlined_call_operand.vmem [shape: f32[24,32], index: 0, kind: input, shape index: {}]
  %s1 = inlined_call_operand.vmem [shape: f32[500,32], index: 1, kind: input, shape index: {}]
  %s2 = inlined_call_operand.vmem [shape: s32[24,1], index: 2, kind: input, shape index: {}]
  %s3 = inlined_call_operand.vmem [shape: f32[24,1], index: 3, kind: output, shape index: {}]
  %s4 = sld [smem:[#allocation0]]
  $region30: #{tpu_custom_call.1} parent=0
    _
  %s6 = ssub.s32 1, %s4
  %s7 = scalar_select 0, %s6, %s4
  // Predicated region
  $region2: #{tpu_custom_call.1} parent=0 // pred_check
    _
  $region3: #{tpu_custom_call.1} parent=0 // pred_check_branch
    %9 = sbr.rel (0) target = $region5
  $region4: #{tpu_custom_call.1} parent=0 // pred_region
    _
  $region5: #{tpu_custom_call.1} parent=0 // pred_fallthru
    _
  // Predicated region
  $region6: #{tpu_custom_call.1} parent=0 // pred_check
    _
  $region7: #{tpu_custom_call.1} parent=0 // pred_check_branch
    %11 = sbr.rel (0) target = $region9
  $region8: #{tpu_custom_call.1} parent=0 // pred_region
    _
  $region9: #{tpu_custom_call.1} parent=0 // pred_fallthru
    _
  // Predicated region
  $region10: #{tpu_custom_call.1} parent=0 // pred_check
    _
  $region11: #{tpu_custom_call.1} parent=0 // pred_check_branch
    %13 = sbr.rel (0) target = $region13
  $region12: #{tpu_custom_call.1} parent=0 // pred_region
    _
  $region13: #{tpu_custom_call.1} parent=0 // pred_fallthru
    _
  %p14 = scmp.eq.s32.totalorder 0, 0
  // Predicated region
  $region14: #{tpu_custom_call.1} parent=0 // pred_check
    %p15 = pneg %p14
  $region15: #{tpu_custom_call.1} parent=0 // pred_check_branch
    %17 = sbr.rel (%p15) target = $region17
  $region16: #{tpu_custom_call.1} parent=0 // pred_region
    %vm18 = vcmask 7168
    %19 = vst.msk [vmem:[#allocation2] sm:$0xff] %vm18, -inf
    %20 = vst.msk [vmem:[#allocation2 + $0x8] sm:$0xff] %vm18, -inf
    %21 = vst.msk [vmem:[#allocation2 + $0x10] sm:$0xff] %vm18, -inf
    %22 = vst.msk [vmem:[#allocation3] sm:$0xff] %vm18, 0.0
    %23 = vst.msk [vmem:[#allocation3 + $0x8] sm:$0xff] %vm18, 0.0
    %24 = vst.msk [vmem:[#allocation3 + $0x10] sm:$0xff] %vm18, 0.0
    %25 = vst.msk [vmem:[#allocation4] sm:$0xff] %vm18, 0.0
    %26 = vst.msk [vmem:[#allocation4 + $0x8] sm:$0xff] %vm18, 0.0
    %27 = vst.msk [vmem:[#allocation4 + $0x10] sm:$0xff] %vm18, 0.0
  $region17: #{tpu_custom_call.1} parent=0 // pred_fallthru
    _
  %v28 = vld [vmem:[%s0] sm:$0xff]
  %v29 = vld [vmem:[%s0 + $0x8] sm:$0xff]
  %v30 = vld [vmem:[%s0 + $0x10] sm:$0xff]
  %v31 = vld [vmem:[%s1] sm:$0xff]
  %v32 = vld [vmem:[%s1 + $0x8] sm:$0xff]
  %v33 = vld [vmem:[%s1 + $0x10] sm:$0xff]
  %v34 = vld [vmem:[%s1 + $0x18] sm:$0xff]
  %v35 = vld [vmem:[%s1 + $0x20] sm:$0xff]
  %v36 = vld [vmem:[%s1 + $0x28] sm:$0xff]
  %v37 = vld [vmem:[%s1 + $0x30] sm:$0xff]
  %v38 = vld [vmem:[%s1 + $0x38] sm:$0xff]
  %v39 = vld [vmem:[%s1 + $0x40] sm:$0xff]
  %v40 = vld [vmem:[%s1 + $0x48] sm:$0xff]
  %v41 = vld [vmem:[%s1 + $0x50] sm:$0xff]
  %v42 = vld [vmem:[%s1 + $0x58] sm:$0xff]
  %v43 = vld [vmem:[%s1 + $0x60] sm:$0xff]
  %v44 = vld [vmem:[%s1 + $0x68] sm:$0xff]
  %v45 = vld [vmem:[%s1 + $0x70] sm:$0xff]
  %v46 = vld [vmem:[%s1 + $0x78] sm:$0xff]
  %v47 = vld [vmem:[%s1 + $0x80] sm:$0xff]
  %v48 = vld [vmem:[%s1 + $0x88] sm:$0xff]
  %v49 = vld [vmem:[%s1 + $0x90] sm:$0xff]
  %v50 = vld [vmem:[%s1 + $0x98] sm:$0xff]
  %v51 = vld [vmem:[%s1 + $0xa0] sm:$0xff]
  %v52 = vld [vmem:[%s1 + $0xa8] sm:$0xff]
  %v53 = vld [vmem:[%s1 + $0xb0] sm:$0xff]
  %v54 = vld [vmem:[%s1 + $0xb8] sm:$0xff]
  %v55 = vld [vmem:[%s1 + $0xc0] sm:$0xff]
  %v56 = vld [vmem:[%s1 + $0xc8] sm:$0xff]
  %v57 = vld [vmem:[%s1 + $0xd0] sm:$0xff]
  %v58 = vld [vmem:[%s1 + $0xd8] sm:$0xff]
  %v59 = vld [vmem:[%s1 + $0xe0] sm:$0xff]
  %v60 = vld [vmem:[%s1 + $0xe8] sm:$0xff]
  %v61 = vld [vmem:[%s1 + $0xf0] sm:$0xff]
  %v62 = vld [vmem:[%s1 + $0xf8] sm:$0xff]
  %v63 = vld [vmem:[%s1 + $0x100] sm:$0xff]
  %v64 = vld [vmem:[%s1 + $0x108] sm:$0xff]
  %v65 = vld [vmem:[%s1 + $0x110] sm:$0xff]
  %v66 = vld [vmem:[%s1 + $0x118] sm:$0xff]
  %v67 = vld [vmem:[%s1 + $0x120] sm:$0xff]
  %v68 = vld [vmem:[%s1 + $0x128] sm:$0xff]
  %v69 = vld [vmem:[%s1 + $0x130] sm:$0xff]
  %v70 = vld [vmem:[%s1 + $0x138] sm:$0xff]
  %v71 = vld [vmem:[%s1 + $0x140] sm:$0xff]
  %v72 = vld [vmem:[%s1 + $0x148] sm:$0xff]
  %v73 = vld [vmem:[%s1 + $0x150] sm:$0xff]
  %v74 = vld [vmem:[%s1 + $0x158] sm:$0xff]
  %v75 = vld [vmem:[%s1 + $0x160] sm:$0xff]
  %v76 = vld [vmem:[%s1 + $0x168] sm:$0xff]
  %v77 = vld [vmem:[%s1 + $0x170] sm:$0xff]
  %v78 = vld [vmem:[%s1 + $0x178] sm:$0xff]
  %v79 = vld [vmem:[%s1 + $0x180] sm:$0xff]
  %v80 = vld [vmem:[%s1 + $0x188] sm:$0xff]
  %v81 = vld [vmem:[%s1 + $0x190] sm:$0xff]
  %v82 = vld [vmem:[%s1 + $0x198] sm:$0xff]
  %v83 = vld [vmem:[%s1 + $0x1a0] sm:$0xff]
  %v84 = vld [vmem:[%s1 + $0x1a8] sm:$0xff]
  %v85 = vld [vmem:[%s1 + $0x1b0] sm:$0xff]
  %v86 = vld [vmem:[%s1 + $0x1b8] sm:$0xff]
  %v87 = vld [vmem:[%s1 + $0x1c0] sm:$0xff]
  %v88 = vld [vmem:[%s1 + $0x1c8] sm:$0xff]
  %v89 = vld [vmem:[%s1 + $0x1d0] sm:$0xff]
  %v90 = vld [vmem:[%s1 + $0x1d8] sm:$0xff]
  %v91 = vld [vmem:[%s1 + $0x1e0] sm:$0xff]
  %v92 = vld [vmem:[%s1 + $0x1e8] sm:$0xff]
  %v93 = vld [vmem:[%s1 + $0x1f0] sm:$0xff]
  %v94 = vld [vmem:[%s1 + $0x1f8] sm:$0xff]
  %vm95 = vcmask 261120
  %v97 = vsel %vm95, %v28, 0
  %v100 = vsel %vm95, %v29, 0
  %v103 = vsel %vm95, %v30, 0
  %v106 = vsel %vm95, %v31, 0
  %v109 = vsel %vm95, %v32, 0
  %v112 = vsel %vm95, %v33, 0
  %v115 = vsel %vm95, %v34, 0
  %v118 = vsel %vm95, %v35, 0
  %v121 = vsel %vm95, %v36, 0
  %v124 = vsel %vm95, %v37, 0
  %v127 = vsel %vm95, %v38, 0
  %v130 = vsel %vm95, %v39, 0
  %v133 = vsel %vm95, %v40, 0
  %v136 = vsel %vm95, %v41, 0
  %v139 = vsel %vm95, %v42, 0
  %v142 = vsel %vm95, %v43, 0
  %v145 = vsel %vm95, %v44, 0
  %v148 = vsel %vm95, %v45, 0
  %v151 = vsel %vm95, %v46, 0
  %v154 = vsel %vm95, %v47, 0
  %v157 = vsel %vm95, %v48, 0
  %v160 = vsel %vm95, %v49, 0
  %v163 = vsel %vm95, %v50, 0
  %v166 = vsel %vm95, %v51, 0
  %v169 = vsel %vm95, %v52, 0
  %v172 = vsel %vm95, %v53, 0
  %v175 = vsel %vm95, %v54, 0
  %v178 = vsel %vm95, %v55, 0
  %v181 = vsel %vm95, %v56, 0
  %v184 = vsel %vm95, %v57, 0
  %v187 = vsel %vm95, %v58, 0
  %v190 = vsel %vm95, %v59, 0
  %v193 = vsel %vm95, %v60, 0
  %v196 = vsel %vm95, %v61, 0
  %v199 = vsel %vm95, %v62, 0
  %v202 = vsel %vm95, %v63, 0
  %v205 = vsel %vm95, %v64, 0
  %v208 = vsel %vm95, %v65, 0
  %v211 = vsel %vm95, %v66, 0
  %v214 = vsel %vm95, %v67, 0
  %v217 = vsel %vm95, %v68, 0
  %v220 = vsel %vm95, %v69, 0
  %v223 = vsel %vm95, %v70, 0
  %v226 = vsel %vm95, %v71, 0
  %v229 = vsel %vm95, %v72, 0
  %v232 = vsel %vm95, %v73, 0
  %v235 = vsel %vm95, %v74, 0
  %v238 = vsel %vm95, %v75, 0
  %v241 = vsel %vm95, %v76, 0
  %v244 = vsel %vm95, %v77, 0
  %v247 = vsel %vm95, %v78, 0
  %v250 = vsel %vm95, %v79, 0
  %v253 = vsel %vm95, %v80, 0
  %v256 = vsel %vm95, %v81, 0
  %v259 = vsel %vm95, %v82, 0
  %v262 = vsel %vm95, %v83, 0
  %v265 = vsel %vm95, %v84, 0
  %v268 = vsel %vm95, %v85, 0
  %v271 = vsel %vm95, %v86, 0
  %v274 = vsel %vm95, %v87, 0
  %v277 = vsel %vm95, %v88, 0
  %v280 = vsel %vm95, %v89, 0
  %v283 = vsel %vm95, %v90, 0
  %v286 = vsel %vm95, %v91, 0
  %v289 = vsel %vm95, %v92, 0
  %v292 = vsel %vm95, %v93, 0
  %v295 = vsel %vm95, %v94, 0
  %297 = vmatprep.subr.mxu0 0.0
  %298 = vmatpush1.xpose.msra.mxu0 %v106
  %299 = vmatprep.subr.mxu0 0.0
  %300 = vmatpush1.xpose.msra.mxu0 %v109
  %301 = vmatprep.subr.mxu0 0.0
  %302 = vmatpush1.xpose.msra.mxu0 %v112
  %303 = vmatprep.subr.mxu0 0.0
  %304 = vmatpush1.xpose.msra.mxu0 %v115
  %305 = vmatprep.subr.mxu0 0.0
  %306 = vmatpush1.xpose.msra.mxu0 %v118
  %307 = vmatprep.subr.mxu0 0.0
  %308 = vmatpush1.xpose.msra.mxu0 %v121
  %309 = vmatprep.subr.mxu0 0.0
  %310 = vmatpush1.xpose.msra.mxu0 %v124
  %311 = vmatprep.subr.mxu0 0.0
  %312 = vmatpush1.xpose.msra.mxu0 %v127
  %313 = vmatprep.subr.mxu0 0.0
  %314 = vmatpush1.xpose.msra.mxu0 %v130
  %315 = vmatprep.subr.mxu0 0.0
  %316 = vmatpush1.xpose.msra.mxu0 %v133
  %317 = vmatprep.subr.mxu0 0.0
  %318 = vmatpush1.xpose.msra.mxu0 %v136
  %319 = vmatprep.subr.mxu0 0.0
  %320 = vmatpush1.xpose.msra.mxu0 %v139
  %321 = vmatprep.subr.mxu0 0.0
  %322 = vmatpush1.xpose.msra.mxu0 %v142
  %323 = vmatprep.subr.mxu0 0.0
  %324 = vmatpush1.xpose.msra.mxu0 %v145
  %325 = vmatprep.subr.mxu0 0.0
  %326 = vmatpush1.xpose.msra.mxu0 %v148
  %327 = vmatprep.subr.mxu0 0.0
  %328 = vmatpush1.xpose.msra.mxu0 %v151
  %329 = vmatprep.subr.mxu0 0.0
  %330 = vmatpush1.xpose.msra.mxu0 %v154
  %331 = vmatprep.subr.mxu0 0.0
  %332 = vmatpush1.xpose.msra.mxu0 %v157
  %333 = vmatprep.subr.mxu0 0.0
  %334 = vmatpush1.xpose.msra.mxu0 %v160
  %335 = vmatprep.subr.mxu0 0.0
  %336 = vmatpush1.xpose.msra.mxu0 %v163
  %337 = vmatprep.subr.mxu0 0.0
  %338 = vmatpush1.xpose.msra.mxu0 %v166
  %339 = vmatprep.subr.mxu0 0.0
  %340 = vmatpush1.xpose.msra.mxu0 %v169
  %341 = vmatprep.subr.mxu0 0.0
  %342 = vmatpush1.xpose.msra.mxu0 %v172
  %343 = vmatprep.subr.mxu0 0.0
  %344 = vmatpush1.xpose.msra.mxu0 %v175
  %345 = vmatprep.subr.mxu0 0.0
  %346 = vmatpush1.xpose.msra.mxu0 %v178
  %347 = vmatprep.subr.mxu0 0.0
  %348 = vmatpush1.xpose.msra.mxu0 %v181
  %349 = vmatprep.subr.mxu0 0.0
  %350 = vmatpush1.xpose.msra.mxu0 %v184
  %351 = vmatprep.subr.mxu0 0.0
  %352 = vmatpush1.xpose.msra.mxu0 %v187
  %353 = vmatprep.subr.mxu0 0.0
  %354 = vmatpush1.xpose.msra.mxu0 %v190
  %355 = vmatprep.subr.mxu0 0.0
  %356 = vmatpush1.xpose.msra.mxu0 %v193
  %357 = vmatprep.subr.mxu0 0.0
  %358 = vmatpush1.xpose.msra.mxu0 %v196
  %359 = vmatprep.subr.mxu0 0.0
  %360 = vmatpush1.xpose.msra.mxu0 %v199
  %361 = vmatprep.mubr.f32.mxu0 0.0
  %362 = vmatmul.mubr.f32.gmra.mrb[0].mxu0 %v97
  %v363 = vpop.f32.mrb[0].mxu0
  %v364 = vadd.f32 0.0, %v363
  %v365 = vpop.f32.mrb[0].mxu0
  %v366 = vadd.f32 0.0, %v365
  %367 = vmatprep.mubr.f32.mxu0 0.0
  %368 = vmatmul.mubr.f32.gmra.mrb[0].mxu0 %v100
  %v369 = vpop.f32.mrb[0].mxu0
  %v370 = vadd.f32 0.0, %v369
  %v371 = vpop.f32.mrb[0].mxu0
  %v372 = vadd.f32 0.0, %v371
  %373 = vmatprep.mubr.f32.mxu0 0.0
  %374 = vmatmul.mubr.f32.gmra.mrb[0].mxu0 %v103
  %v375 = vpop.f32.mrb[0].mxu0
  %v376 = vadd.f32 0.0, %v375
  %v377 = vpop.f32.mrb[0].mxu0
  %v378 = vadd.f32 0.0, %v377
  %379 = vdwg.mxu0
  %380 = vmatprep.subr.mxu0 0.0
  %381 = vmatpush1.xpose.msra.mxu0 %v202
  %382 = vmatprep.subr.mxu0 0.0
  %383 = vmatpush1.xpose.msra.mxu0 %v205
  %384 = vmatprep.subr.mxu0 0.0
  %385 = vmatpush1.xpose.msra.mxu0 %v208
  %386 = vmatprep.subr.mxu0 0.0
  %387 = vmatpush1.xpose.msra.mxu0 %v211
  %388 = vmatprep.subr.mxu0 0.0
  %389 = vmatpush1.xpose.msra.mxu0 %v214
  %390 = vmatprep.subr.mxu0 0.0
  %391 = vmatpush1.xpose.msra.mxu0 %v217
  %392 = vmatprep.subr.mxu0 0.0
  %393 = vmatpush1.xpose.msra.mxu0 %v220
  %394 = vmatprep.subr.mxu0 0.0
  %395 = vmatpush1.xpose.msra.mxu0 %v223
  %396 = vmatprep.subr.mxu0 0.0
  %397 = vmatpush1.xpose.msra.mxu0 %v226
  %398 = vmatprep.subr.mxu0 0.0
  %399 = vmatpush1.xpose.msra.mxu0 %v229
  %400 = vmatprep.subr.mxu0 0.0
  %401 = vmatpush1.xpose.msra.mxu0 %v232
  %402 = vmatprep.subr.mxu0 0.0
  %403 = vmatpush1.xpose.msra.mxu0 %v235
  %404 = vmatprep.subr.mxu0 0.0
  %405 = vmatpush1.xpose.msra.mxu0 %v238
  %406 = vmatprep.subr.mxu0 0.0
  %407 = vmatpush1.xpose.msra.mxu0 %v241
  %408 = vmatprep.subr.mxu0 0.0
  %409 = vmatpush1.xpose.msra.mxu0 %v244
  %410 = vmatprep.subr.mxu0 0.0
  %411 = vmatpush1.xpose.msra.mxu0 %v247
  %412 = vmatprep.subr.mxu0 0.0
  %413 = vmatpush1.xpose.msra.mxu0 %v250
  %414 = vmatprep.subr.mxu0 0.0
  %415 = vmatpush1.xpose.msra.mxu0 %v253
  %416 = vmatprep.subr.mxu0 0.0
  %417 = vmatpush1.xpose.msra.mxu0 %v256
  %418 = vmatprep.subr.mxu0 0.0
  %419 = vmatpush1.xpose.msra.mxu0 %v259
  %420 = vmatprep.subr.mxu0 0.0
  %421 = vmatpush1.xpose.msra.mxu0 %v262
  %422 = vmatprep.subr.mxu0 0.0
  %423 = vmatpush1.xpose.msra.mxu0 %v265
  %424 = vmatprep.subr.mxu0 0.0
  %425 = vmatpush1.xpose.msra.mxu0 %v268
  %426 = vmatprep.subr.mxu0 0.0
  %427 = vmatpush1.xpose.msra.mxu0 %v271
  %428 = vmatprep.subr.mxu0 0.0
  %429 = vmatpush1.xpose.msra.mxu0 %v274
  %430 = vmatprep.subr.mxu0 0.0
  %431 = vmatpush1.xpose.msra.mxu0 %v277
  %432 = vmatprep.subr.mxu0 0.0
  %433 = vmatpush1.xpose.msra.mxu0 %v280
  %434 = vmatprep.subr.mxu0 0.0
  %435 = vmatpush1.xpose.msra.mxu0 %v283
  %436 = vmatprep.subr.mxu0 0.0
  %437 = vmatpush1.xpose.msra.mxu0 %v286
  %438 = vmatprep.subr.mxu0 0.0
  %439 = vmatpush1.xpose.msra.mxu0 %v289
  %440 = vmatprep.subr.mxu0 0.0
  %441 = vmatpush1.xpose.msra.mxu0 %v292
  %442 = vmatprep.subr.mxu0 0.0
  %443 = vmatpush1.xpose.msra.mxu0 %v295
  %444 = vmatprep.mubr.f32.mxu0 0.0
  %445 = vmatmul.mubr.f32.gmra.mrb[0].mxu0 %v97
  %v446 = vpop.f32.mrb[0].mxu0
  %v447 = vadd.f32 0.0, %v446
  %v448 = vpop.f32.mrb[0].mxu0
  %v449 = vadd.f32 0.0, %v448
  %450 = vmatprep.mubr.f32.mxu0 0.0
  %451 = vmatmul.mubr.f32.gmra.mrb[0].mxu0 %v100
  %v452 = vpop.f32.mrb[0].mxu0
  %v453 = vadd.f32 0.0, %v452
  %v454 = vpop.f32.mrb[0].mxu0
  %v455 = vadd.f32 0.0, %v454
  %456 = vmatprep.mubr.f32.mxu0 0.0
  %457 = vmatmul.mubr.f32.gmra.mrb[0].mxu0 %v103
  %v458 = vpop.f32.mrb[0].mxu0
  %v459 = vadd.f32 0.0, %v458
  %v460 = vpop.f32.mrb[0].mxu0
  %v461 = vadd.f32 0.0, %v460
  %462 = vdwg.mxu0
  %v463 = vlaneseq
  %v464 = vand.u32 %v463, 127
  %v465 = vadd.s32 %v464, 128
  %v466 = vadd.s32 %v464, 256
  %v467 = vadd.s32 %v464, 384
  %s468 = smul.u32 0, 512
  %s469 = ssub.s32 500, %s468
  %v470 = vstv %s469
  %vm471 = vcmp.lt.s32.totalorder %v464, %v470
  %vm472 = vcmp.lt.s32.totalorder %v465, %v470
  %vm473 = vcmp.lt.s32.totalorder %v466, %v470
  %vm474 = vcmp.lt.s32.totalorder %v467, %v470
  %v475 = vsel %vm471, %v364, -inf
  %v476 = vsel %vm472, %v366, -inf
  %v477 = vsel %vm473, %v447, -inf
  %v478 = vsel %vm474, %v449, -inf
  %v479 = vsel %vm471, %v370, -inf
  %v480 = vsel %vm472, %v372, -inf
  %v481 = vsel %vm473, %v453, -inf
  %v482 = vsel %vm474, %v455, -inf
  %v483 = vsel %vm471, %v376, -inf
  %v484 = vsel %vm472, %v378, -inf
  %v485 = vsel %vm473, %v459, -inf
  %v486 = vsel %vm474, %v461, -inf
  %v487 = vld [vmem:[#allocation2] sm:$0xff]
  %v488 = vld [vmem:[#allocation2 + $0x8] sm:$0xff]
  %v489 = vld [vmem:[#allocation2 + $0x10] sm:$0xff]
  %v490 = vmax.f32 %v475, %v477
  %v491 = vmax.f32 %v476, %v478
  %v492 = vmax.f32 %v490, %v491
  %493 = vmax.xlane.f32.xlu0 %v492
  %v494 = vpop.xlane.xlu0 %493
  %v495 = vmax.f32 %v479, %v481
  %v496 = vmax.f32 %v480, %v482
  %v497 = vmax.f32 %v495, %v496
  %498 = vmax.xlane.f32.xlu0 %v497
  %v499 = vpop.xlane.xlu0 %498
  %v500 = vmax.f32 %v483, %v485
  %v501 = vmax.f32 %v484, %v486
  %v502 = vmax.f32 %v500, %v501
  %503 = vmax.xlane.f32.xlu0 %v502
  %v504 = vpop.xlane.xlu0 %503
  %v505 = vmax.f32 %v487, %v494
  %v506 = vmax.f32 %v488, %v499
  %v507 = vmax.f32 %v489, %v504
  %v508 = vld [vmem:[#allocation3] sm:$0xff]
  %v509 = vld [vmem:[#allocation3 + $0x8] sm:$0xff]
  %v510 = vld [vmem:[#allocation3 + $0x10] sm:$0xff]
  %v511 = vsub.f32 %v487, %v505
  %v512 = vsub.f32 %v488, %v506
  %v513 = vsub.f32 %v489, %v507
  %v514 = vmul.f32 %v511, 1.442695
  %v515 = vpow.pop %v514
  %v516 = vmul.f32 %v512, 1.442695
  %v517 = vpow.pop %v516
  %v518 = vmul.f32 %v513, 1.442695
  %v519 = vpow.pop %v518
  %v520 = vmul.f32 %v508, %v515
  %v521 = vmul.f32 %v509, %v517
  %v522 = vmul.f32 %v510, %v519
  %524 = vset.pattern.permute.xlu0 0
  %525 = vperm.xlu0 %524, %v505
  %v526 = vpop.permute.xlu0 %525
  %529 = vset.pattern.permute.xlu0 0
  %530 = vperm.xlu0 %529, %v506
  %v531 = vpop.permute.xlu0 %530
  %534 = vset.pattern.permute.xlu0 0
  %535 = vperm.xlu0 %534, %v507
  %v536 = vpop.permute.xlu0 %535
  %v538 = vsub.f32 %v475, %v526
  %v539 = vsub.f32 %v476, %v526
  %v540 = vsub.f32 %v477, %v526
  %v541 = vsub.f32 %v478, %v526
  %v542 = vsub.f32 %v479, %v531
  %v543 = vsub.f32 %v480, %v531
  %v544 = vsub.f32 %v481, %v531
  %v545 = vsub.f32 %v482, %v531
  %v546 = vsub.f32 %v483, %v536
  %v547 = vsub.f32 %v484, %v536
  %v548 = vsub.f32 %v485, %v536
  %v549 = vsub.f32 %v486, %v536
  %v550 = vmul.f32 %v538, 1.442695
  %v551 = vpow.pop %v550
  %v552 = vmul.f32 %v539, 1.442695
  %v553 = vpow.pop %v552
  %v554 = vmul.f32 %v540, 1.442695
  %v555 = vpow.pop %v554
  %v556 = vmul.f32 %v541, 1.442695
  %v557 = vpow.pop %v556
  %v558 = vmul.f32 %v542, 1.442695
  %v559 = vpow.pop %v558
  %v560 = vmul.f32 %v543, 1.442695
  %v561 = vpow.pop %v560
  %v562 = vmul.f32 %v544, 1.442695
  %v563 = vpow.pop %v562
  %v564 = vmul.f32 %v545, 1.442695
  %v565 = vpow.pop %v564
  %v566 = vmul.f32 %v546, 1.442695
  %v567 = vpow.pop %v566
  %v568 = vmul.f32 %v547, 1.442695
  %v569 = vpow.pop %v568
  %v570 = vmul.f32 %v548, 1.442695
  %v571 = vpow.pop %v570
  %v572 = vmul.f32 %v549, 1.442695
  %v573 = vpow.pop %v572
  %v574 = vadd.f32 %v551, %v553
  %v575 = vadd.f32 %v574, %v555
  %v576 = vadd.f32 %v575, %v557
  %577 = vadd.xlane.f32.xlu0 %v576
  %v578 = vpop.xlane.xlu0 %577
  %v579 = vadd.f32 %v559, %v561
  %v580 = vadd.f32 %v579, %v563
  %v581 = vadd.f32 %v580, %v565
  %582 = vadd.xlane.f32.xlu0 %v581
  %v583 = vpop.xlane.xlu0 %582
  %v584 = vadd.f32 %v567, %v569
  %v585 = vadd.f32 %v584, %v571
  %v586 = vadd.f32 %v585, %v573
  %587 = vadd.xlane.f32.xlu0 %v586
  %v588 = vpop.xlane.xlu0 %587
  %v589 = vadd.f32 %v520, %v578
  %v590 = vadd.f32 %v521, %v583
  %v591 = vadd.f32 %v522, %v588
  %vm592 = vcmask 7168
  %593 = vst.msk [vmem:[#allocation3] sm:$0xff] %vm592, %v589
  %594 = vst.msk [vmem:[#allocation3 + $0x8] sm:$0xff] %vm592, %v590
  %595 = vst.msk [vmem:[#allocation3 + $0x10] sm:$0xff] %vm592, %v591
  %596 = vst.msk [vmem:[#allocation2] sm:$0xff] %vm592, %v505
  %597 = vst.msk [vmem:[#allocation2 + $0x8] sm:$0xff] %vm592, %v506
  %598 = vst.msk [vmem:[#allocation2 + $0x10] sm:$0xff] %vm592, %v507
  %v599 = vld [vmem:[%s2] sm:$0xff]
  %v600 = vld [vmem:[%s2 + $0x8] sm:$0xff]
  %v601 = vld [vmem:[%s2 + $0x10] sm:$0xff]
  %vm602 = vcmp.eq.s32.totalorder %v599, 4294967196
  %vm603 = vcmp.eq.s32.totalorder %v600, 4294967196
  %vm604 = vcmp.eq.s32.totalorder %v601, 4294967196
  %v605 = vsel %vm602, 0, %v599
  %v606 = vsel %vm603, 0, %v600
  %v607 = vsel %vm604, 0, %v601
  %v608 = vstv %s468
  %v609 = vsub.s32 %v605, %v608
  %v610 = vsub.s32 %v606, %v608
  %v611 = vsub.s32 %v607, %v608
  %v612 = vld [vmem:[#allocation4] sm:$0xff]
  %v613 = vld [vmem:[#allocation4 + $0x8] sm:$0xff]
  %v614 = vld [vmem:[#allocation4 + $0x10] sm:$0xff]
  %615 = vset.pattern.permute.xlu0 0
  %616 = vperm.xlu0 %615, %v609
  %v617 = vpop.permute.xlu0 %616
  %618 = vset.pattern.permute.xlu0 0
  %619 = vperm.xlu0 %618, %v610
  %v620 = vpop.permute.xlu0 %619
  %621 = vset.pattern.permute.xlu0 0
  %622 = vperm.xlu0 %621, %v611
  %v623 = vpop.permute.xlu0 %622
  %vm624 = vcmp.eq.s32.totalorder %v464, %v617
  %vm625 = vcmp.eq.s32.totalorder %v465, %v617
  %vm626 = vcmp.eq.s32.totalorder %v466, %v617
  %vm627 = vcmp.eq.s32.totalorder %v467, %v617
  %vm628 = vcmp.eq.s32.totalorder %v464, %v620
  %vm629 = vcmp.eq.s32.totalorder %v465, %v620
  %vm630 = vcmp.eq.s32.totalorder %v466, %v620
  %vm631 = vcmp.eq.s32.totalorder %v467, %v620
  %vm632 = vcmp.eq.s32.totalorder %v464, %v623
  %vm633 = vcmp.eq.s32.totalorder %v465, %v623
  %vm634 = vcmp.eq.s32.totalorder %v466, %v623
  %vm635 = vcmp.eq.s32.totalorder %v467, %v623
  %v636 = vsel %vm624, %v475, 0.0
  %v637 = vsel %vm625, %v476, 0.0
  %v638 = vsel %vm626, %v477, 0.0
  %v639 = vsel %vm627, %v478, 0.0
  %v640 = vsel %vm628, %v479, 0.0
  %v641 = vsel %vm629, %v480, 0.0
  %v642 = vsel %vm630, %v481, 0.0
  %v643 = vsel %vm631, %v482, 0.0
  %v644 = vsel %vm632, %v483, 0.0
  %v645 = vsel %vm633, %v484, 0.0
  %v646 = vsel %vm634, %v485, 0.0
  %v647 = vsel %vm635, %v486, 0.0
  %v648 = vadd.f32 %v636, %v637
  %v649 = vadd.f32 %v648, %v638
  %v650 = vadd.f32 %v649, %v639
  %651 = vadd.xlane.f32.xlu0 %v650
  %v652 = vpop.xlane.xlu0 %651
  %v653 = vadd.f32 %v640, %v641
  %v654 = vadd.f32 %v653, %v642
  %v655 = vadd.f32 %v654, %v643
  %656 = vadd.xlane.f32.xlu0 %v655
  %v657 = vpop.xlane.xlu0 %656
  %v658 = vadd.f32 %v644, %v645
  %v659 = vadd.f32 %v658, %v646
  %v660 = vadd.f32 %v659, %v647
  %661 = vadd.xlane.f32.xlu0 %v660
  %v662 = vpop.xlane.xlu0 %661
  %v663 = vadd.f32 %v612, %v652
  %v664 = vadd.f32 %v613, %v657
  %v665 = vadd.f32 %v614, %v662
  %666 = vst.msk [vmem:[#allocation4] sm:$0xff] %vm592, %v663
  %667 = vst.msk [vmem:[#allocation4 + $0x8] sm:$0xff] %vm592, %v664
  %668 = vst.msk [vmem:[#allocation4 + $0x10] sm:$0xff] %vm592, %v665
  // Predicated region
  $region18: #{tpu_custom_call.1} parent=0 // pred_check
    %p669 = pneg %p14
  $region19: #{tpu_custom_call.1} parent=0 // pred_check_branch
    %671 = sbr.rel (%p669) target = $region21
  $region20: #{tpu_custom_call.1} parent=0 // pred_region
    %v672 = vld [vmem:[#allocation2] sm:$0xff]
    %v673 = vld [vmem:[#allocation2 + $0x8] sm:$0xff]
    %v674 = vld [vmem:[#allocation2 + $0x10] sm:$0xff]
    %v675 = vld [vmem:[#allocation3] sm:$0xff]
    %v676 = vld [vmem:[#allocation3 + $0x8] sm:$0xff]
    %v677 = vld [vmem:[#allocation3 + $0x10] sm:$0xff]
    %v678 = vlog2.pop %v675
    %v679 = vmul.f32 %v678, 0.6931472
    %v680 = vlog2.pop %v676
    %v681 = vmul.f32 %v680, 0.6931472
    %v682 = vlog2.pop %v677
    %v683 = vmul.f32 %v682, 0.6931472
    %v684 = vadd.f32 %v672, %v679
    %v685 = vadd.f32 %v673, %v681
    %v686 = vadd.f32 %v674, %v683
    %v687 = vld [vmem:[#allocation4] sm:$0xff]
    %v688 = vld [vmem:[#allocation4 + $0x8] sm:$0xff]
    %v689 = vld [vmem:[#allocation4 + $0x10] sm:$0xff]
    %v690 = vsub.f32 %v687, %v684
    %v691 = vsub.f32 %v688, %v685
    %v692 = vsub.f32 %v689, %v686
    %693 = vst.msk [vmem:[%s3] sm:$0xff] %vm592, %v690
    %694 = vst.msk [vmem:[%s3 + $0x8] sm:$0xff] %vm592, %v691
    %695 = vst.msk [vmem:[%s3 + $0x10] sm:$0xff] %vm592, %v692
  $region21: #{tpu_custom_call.1} parent=0 // pred_fallthru
    _
  // Predicated region
  $region22: #{tpu_custom_call.1} parent=0 // pred_check
    _
  $region23: #{tpu_custom_call.1} parent=0 // pred_check_branch
    %697 = sbr.rel (0) target = $region25
  $region24: #{tpu_custom_call.1} parent=0 // pred_region
    _
  $region25: #{tpu_custom_call.1} parent=0 // pred_fallthru
    _
  // Predicated region
  $region26: #{tpu_custom_call.1} parent=0 // pred_check
    _
  $region27: #{tpu_custom_call.1} parent=0 // pred_check_branch
    %699 = sbr.rel (0) target = $region29
  $region28: #{tpu_custom_call.1} parent=0 // pred_region
    _
  $region29: #{tpu_custom_call.1} parent=0 // pred_fallthru
    _

</llo_original>
